<compile_context>
chip_gen: v6e
topology: v6e:2x2x1
jax: 0.10.0
libtpu: 0.0.40
codegen_flags: <defaults>
</compile_context>

<pallas_src>
import jax
import jax.numpy as jnp
from jax import lax
from jax.experimental import pallas as pl
from jax.experimental.pallas import tpu as pltpu


def _self_attn_kernel(x_ref, wqkv_ref, bqkv_ref, gamma_ref, o_ref):
    bt, n, d = x_ref.shape
    seg = wqkv_ref.shape[1] // 3          # 128-lane-aligned segment per projection

    x = x_ref[...]                        # (bt, n, d) f32, kept for the residual
    x2d = x.reshape(bt * n, d)

    # Fused QKV projection on a (bt*n, d) slab.  Weight is pre-transposed and padded
    # host-side to (d, 3*seg) bf16; bf16 operands, f32 MXU accumulation, f32 bias add.
    qkv = jnp.dot(x2d.astype(jnp.bfloat16), wqkv_ref[...],
                  preferred_element_type=jnp.float32) + bqkv_ref[...]   # (bt*n, 3*seg) f32

    # Tile-aligned slices (each segment starts on a 128-lane boundary -> no lane rotate).
    q = qkv[:, 0:d].reshape(bt, n, d)
    k = qkv[:, seg:seg + d].reshape(bt, n, d)
    v = qkv[:, 2 * seg:2 * seg + d].reshape(bt, n, d)

    # Transposed energy: energy_t[b, j, i] = sum_n k[b,n,j] * q[b,n,i]
    # (== energy[b,i,j] of the PyTorch module, stored transposed so the second
    #  matmul below is a plain contraction -> no XLU transpose of the attention tile).
    energy_t = lax.dot_general(k.astype(jnp.bfloat16), q.astype(jnp.bfloat16),
                               (((1,), (1,)), ((0,), (0,))),
                               preferred_element_type=jnp.float32)      # (bt, d, d)

    # softmax(dim=-1) of energy == softmax over j == axis 1 of energy_t; f32 math.
    m = jnp.max(energy_t, axis=1, keepdims=True)
    e = jnp.exp(energy_t - m)
    denom = jnp.sum(e, axis=1, keepdims=True)
    attn_t = e * pl.reciprocal(denom, approx=True)                      # attn_t[b, j, i]

    # out[b,n,i] = sum_j v[b,n,j] * attn[b,i,j] = sum_j v[b,n,j] * attn_t[b,j,i]
    out_attn = lax.dot_general(v.astype(jnp.bfloat16), attn_t.astype(jnp.bfloat16),
                               (((2,), (1,)), ((0,), (0,))),
                               preferred_element_type=jnp.float32)      # (bt, n, d)

    gamma = gamma_ref[0]                                                # SMEM scalar
    out3 = gamma * out_attn + x                                         # (bt, n, d) f32

    # Lane-dense store: fold (n, d) -> n*d lanes (row-major, so the host reshape back
    # to (B, N, D) is exact).  Spelled as a lane-axis concat of the n sublane rows to
    # stay on a well-supported lowering path instead of a generic minor-dim reshape.
    out2d = jnp.concatenate([out3[:, i, :] for i in range(n)], axis=-1)  # (bt, n*d)
    o_ref[...] = out2d.astype(o_ref.dtype)


def _pick_block_b(batch, n, d, seg, *, vmem_budget=12 << 20, target_rows=512):
    """Choose the batch tile bt (a divisor of `batch`).

    Constraints / goals:
      * bt == batch or bt % 8 == 0, so the lane-dense (bt, n*d) output block obeys
        the (8, 128) sublane rule.
      * grow bt until the fused-QKV LHS has >= target_rows rows (fills the MXU M
        tile, amortizes ~0.35us per grid step); stop early only while >= 2 grid
        steps remain, so v7x's two TensorCores can split the grid on large batches.
        For small B on 1-TC v5e/v6e this collapses to a single grid step.
      * capped by a conservative per-step VMEM estimate (v7x: 64 MiB physical).
    """
    def vmem_est(bt):
        rows = bt * n
        x_b = rows * d * 4            # x block (f32)
        out_b = rows * d * 4          # lane-dense out block (f32)
        w_b = d * 3 * seg * 2         # bf16 fused weight
        b_b = 3 * seg * 4             # bias
        qkv_b = rows * 3 * seg * 4    # qkv intermediate
        att_b = bt * d * d * 4        # energy / attn tiles
        # double-buffered pipelined blocks + live intermediates (rough upper bound)
        return 2 * (x_b + out_b + w_b + b_b) + qkv_b + 3 * att_b + 3 * x_b

    best = None
    for bt in range(1, batch + 1):
        if batch % bt:
            continue
        if not (bt == batch or bt % 8 == 0):
            continue
        if vmem_est(bt) > vmem_budget:
            continue
        best = bt
        if bt * n >= target_rows and batch // bt >= 2:
            break
    # Fallback: a single grid step (bt == batch always satisfies the layout rule).
    return best if best is not None else batch


def self_attn_forward(x, wq, bq, wk, bk, wv, bv, gamma):
    """x: (B, N, D) f32; wq/wk/wv: (D, D) PyTorch (out,in); bq/bk/bv: (D,); gamma scalar."""
    B, N, D = x.shape
    seg = -(-D // 128) * 128          # round each projection up to a 128-lane tile

    # Host-side: y = x @ W.T + b for each of q/k/v -> one fused, pre-transposed,
    # lane-tile-padded weight (D, 3*seg) shipped as bf16, and a padded f32 bias.
    def pad_w(w):
        return jnp.pad(w.T.astype(jnp.float32), ((0, 0), (0, seg - D)))

    def pad_b(b):
        return jnp.pad(b.astype(jnp.float32), (0, seg - D))

    wqkv = jnp.concatenate([pad_w(wq), pad_w(wk), pad_w(wv)], axis=1).astype(jnp.bfloat16)
    bqkv = jnp.concatenate([pad_b(bq), pad_b(bk), pad_b(bv)]).reshape(1, 3 * seg)
    gamma1 = jnp.asarray(gamma, jnp.float32).reshape(1,)   # 1-D SMEM scalar (4 bytes)

    bt = _pick_block_b(B, N, D, seg)
    grid = (B // bt,)

    out_flat = pl.pallas_call(
        _self_attn_kernel,
        out_shape=jax.ShapeDtypeStruct((B, N * D), x.dtype),   # lane-dense output slab
        grid_spec=pltpu.PrefetchScalarGridSpec(
            num_scalar_prefetch=0,
            grid=grid,
            in_specs=[
                pl.BlockSpec((bt, N, D), lambda b: (b, 0, 0)),        # x
                pl.BlockSpec((D, 3 * seg), lambda b: (0, 0)),         # Wqkv (bf16, padded)
                pl.BlockSpec((1, 3 * seg), lambda b: (0, 0)),         # bqkv (f32, padded)
                pl.BlockSpec(memory_space=pltpu.MemorySpace.SMEM),    # gamma
            ],
            out_specs=pl.BlockSpec((bt, N * D), lambda b: (b, 0)),
        ),
        compiler_params=pltpu.CompilerParams(
            dimension_semantics=("parallel",),
            vmem_limit_bytes=32 * 1024 * 1024,   # explicit; safe on v5e/v6e/v7x
        ),
    )(x, wqkv, bqkv, gamma1)

    return out_flat.reshape(B, N, D)


def self_attn_reference(x, wq, bq, wk, bk, wv, bv, gamma, *, matmul_dtype=jnp.float32):
    """Pure-JAX reference mirroring the PyTorch forward.

    matmul_dtype=jnp.bfloat16 mimics the kernel's bf16-operand / f32-accumulate
    matmuls so the kernel can be checked tightly against matched precision.
    """
    md = matmul_dtype

    def proj(w, b):
        return jnp.einsum('bnd,ed->bne', x.astype(md), w.astype(md),
                          preferred_element_type=jnp.float32) + b

    q = proj(wq, bq)                               # (B, N, D)
    k = proj(wk, bk)
    v = proj(wv, bv)
    energy = jnp.einsum('bni,bnj->bij', q.astype(md), k.astype(md),
                        preferred_element_type=jnp.float32)            # (B, D, D)
    attn = jax.nn.softmax(energy, axis=-1)
    out = jnp.einsum('bnj,bij->bni', v.astype(md), attn.astype(md),
                     preferred_element_type=jnp.float32)               # (B, N, D)
    return gamma * out + x


if __name__ == "__main__":
    key = jax.random.PRNGKey(0)
    B, N, D = 2, 8, 32  # batch, max_length, attn_size (hidden)

    kx, kwq, kbq, kwk, kbk, kwv, kbv = jax.random.split(key, 7)
    x = jax.random.normal(kx, (B, N, D), dtype=jnp.float32)

    # nn.Linear-style deterministic init (uniform in [-1/sqrt(D), 1/sqrt(D)])
    bound = 1.0 / jnp.sqrt(jnp.float32(D))
    wq = jax.random.uniform(kwq, (D, D), jnp.float32, -bound, bound)
    bq = jax.random.uniform(kbq, (D,), jnp.float32, -bound, bound)
    wk = jax.random.uniform(kwk, (D, D), jnp.float32, -bound, bound)
    bk = jax.random.uniform(kbk, (D,), jnp.float32, -bound, bound)
    wv = jax.random.uniform(kwv, (D, D), jnp.float32, -bound, bound)
    bv = jax.random.uniform(kbv, (D,), jnp.float32, -bound, bound)

    # gamma = 0 (the module's init value): out must equal x exactly.
    gamma0 = jnp.float32(0.0)
    out0 = jax.block_until_ready(self_attn_forward(x, wq, bq, wk, bk, wv, bv, gamma0))
    ref0 = self_attn_reference(x, wq, bq, wk, bk, wv, bv, gamma0)
    assert out0.shape == (B, N, D)
    assert jnp.allclose(out0, ref0, atol=1e-5, rtol=1e-5)

    # Nonzero gamma exercises the full attention path.
    gamma_nz = jnp.float32(0.5)
    out_nz = jax.block_until_ready(self_attn_forward(x, wq, bq, wk, bk, wv, bv, gamma_nz))
    # (a) tight check against a precision-matched (bf16 MXU operands) reference;
    #     remaining diff is f32 reduction order + the EUP approx reciprocal.
    ref_bf16 = self_attn_reference(x, wq, bq, wk, bk, wv, bv, gamma_nz,
                                   matmul_dtype=jnp.bfloat16)
    assert jnp.allclose(out_nz, ref_bf16, atol=1e-2, rtol=1e-2)
    # (b) looser check against exact f32 math (bf16 MXU operands + approx reciprocal
    #     are the only precision tradeoffs).
    ref_f32 = self_attn_reference(x, wq, bq, wk, bk, wv, bv, gamma_nz)
    assert jnp.allclose(out_nz, ref_f32, atol=5e-2, rtol=5e-2)

    print("KERNEL_OK")
</pallas_src>

<mosaic_0001>
module attributes {stable_mosaic.version = 11 : i64} {
  func.func @_self_attn_kernel(%arg0: i32, %arg1: memref<2x8x32xf32, #tpu.memory_space<vmem>>, %arg2: memref<32x384xbf16, #tpu.memory_space<vmem>>, %arg3: memref<1x384xf32, #tpu.memory_space<vmem>>, %arg4: memref<1xf32, #tpu.memory_space<smem>>, %arg5: memref<2x256xf32, #tpu.memory_space<vmem>>) attributes {dimension_semantics = [#tpu.dimension_semantics<parallel>], iteration_bounds = array<i64: 1>, scalar_prefetch = 0 : i64, scratch_operands = 0 : i64, tpu.core_type = #tpu.core_type<tc>, window_params = [{transform_indices = @transform_0, window_bounds = array<i64: 2, 8, 32>}, {pipeline_mode = #tpu.pipeline_mode<synchronous>, transform_indices = @transform_1, window_bounds = array<i64: 32, 384>}, {pipeline_mode = #tpu.pipeline_mode<synchronous>, transform_indices = @transform_2, window_bounds = array<i64: 1, 384>}, {transform_indices = @transform_3, window_bounds = array<i64: 1>}, {transform_indices = @transform_4, window_bounds = array<i64: 2, 256>}]} {
    %c0 = arith.constant 0 : index
    %c0_0 = arith.constant 0 : index
    %c0_1 = arith.constant 0 : index
    %0 = vector.load %arg1[%c0, %c0_0, %c0_1] : memref<2x8x32xf32, #tpu.memory_space<vmem>>, vector<2x8x32xf32>
    %1 = vector.shape_cast %0 : vector<2x8x32xf32> to vector<16x32xf32>
    %2 = arith.truncf %1 : vector<16x32xf32> to vector<16x32xbf16>
    %c0_2 = arith.constant 0 : index
    %c0_3 = arith.constant 0 : index
    %3 = vector.load %arg2[%c0_2, %c0_3] : memref<32x384xbf16, #tpu.memory_space<vmem>>, vector<32x384xbf16>
    %cst = arith.constant dense<0.000000e+00> : vector<16x384xf32>
    %4 = tpu.matmul %2, %3, %cst {dimension_numbers = #tpu.dot_dimension_numbers<[1], [0], [0], [1], [0, 0, 1, 1], [], []>} : vector<16x32xbf16>, vector<32x384xbf16>, vector<16x384xf32> -> vector<16x384xf32>
    %c0_4 = arith.constant 0 : index
    %c0_5 = arith.constant 0 : index
    %5 = vector.load %arg3[%c0_4, %c0_5] : memref<1x384xf32, #tpu.memory_space<vmem>>, vector<1x384xf32>
    %6 = vector.broadcast %5 : vector<1x384xf32> to vector<16x384xf32>
    %7 = arith.addf %4, %6 : vector<16x384xf32>
    %8 = vector.extract_strided_slice %7 {offsets = [0, 0], sizes = [16, 32], strides = [1, 1]} : vector<16x384xf32> to vector<16x32xf32>
    %9 = vector.shape_cast %8 : vector<16x32xf32> to vector<2x8x32xf32>
    %10 = vector.extract_strided_slice %7 {offsets = [0, 128], sizes = [16, 32], strides = [1, 1]} : vector<16x384xf32> to vector<16x32xf32>
    %11 = vector.shape_cast %10 : vector<16x32xf32> to vector<2x8x32xf32>
    %12 = vector.extract_strided_slice %7 {offsets = [0, 256], sizes = [16, 32], strides = [1, 1]} : vector<16x384xf32> to vector<16x32xf32>
    %13 = vector.shape_cast %12 : vector<16x32xf32> to vector<2x8x32xf32>
    %14 = arith.truncf %11 : vector<2x8x32xf32> to vector<2x8x32xbf16>
    %15 = arith.truncf %9 : vector<2x8x32xf32> to vector<2x8x32xbf16>
    %cst_6 = arith.constant dense<0.000000e+00> : vector<2x32x32xf32>
    %16 = tpu.matmul %14, %15, %cst_6 {dimension_numbers = #tpu.dot_dimension_numbers<[1], [1], [2], [2], [0, 0, 0, 2, 1, 2], [0], [0]>} : vector<2x8x32xbf16>, vector<2x8x32xbf16>, vector<2x32x32xf32> -> vector<2x32x32xf32>
    %cst_7 = arith.constant dense<0xFF800000> : vector<2x32xf32>
    %17 = vector.multi_reduction <maximumf>, %16, %cst_7 [1] : vector<2x32x32xf32> to vector<2x32xf32>
    %18 = vector.shape_cast %17 : vector<2x32xf32> to vector<2x1x32xf32>
    %19 = vector.broadcast %18 : vector<2x1x32xf32> to vector<2x32x32xf32>
    %20 = arith.subf %16, %19 : vector<2x32x32xf32>
    %21 = math.exp %20 : vector<2x32x32xf32>
    %cst_8 = arith.constant dense<0.000000e+00> : vector<2x32xf32>
    %22 = vector.multi_reduction <add>, %21, %cst_8 [1] : vector<2x32x32xf32> to vector<2x32xf32>
    %23 = vector.shape_cast %22 : vector<2x32xf32> to vector<2x1x32xf32>
    %24 = tpu.reciprocal %23 {approx = true} : vector<2x1x32xf32> -> vector<2x1x32xf32>
    %25 = vector.broadcast %24 : vector<2x1x32xf32> to vector<2x32x32xf32>
    %26 = arith.mulf %21, %25 : vector<2x32x32xf32>
    %27 = arith.truncf %13 : vector<2x8x32xf32> to vector<2x8x32xbf16>
    %28 = arith.truncf %26 : vector<2x32x32xf32> to vector<2x32x32xbf16>
    %cst_9 = arith.constant dense<0.000000e+00> : vector<2x8x32xf32>
    %29 = tpu.matmul %27, %28, %cst_9 {dimension_numbers = #tpu.dot_dimension_numbers<[2], [1], [1], [2], [0, 0, 0, 1, 1, 2], [0], [0]>} : vector<2x8x32xbf16>, vector<2x32x32xbf16>, vector<2x8x32xf32> -> vector<2x8x32xf32>
    %c0_10 = arith.constant 0 : index
    %30 = memref.load %arg4[%c0_10] : memref<1xf32, #tpu.memory_space<smem>>
    %31 = vector.broadcast %30 : f32 to vector<2x8x32xf32>
    %32 = arith.mulf %31, %29 : vector<2x8x32xf32>
    %33 = arith.addf %32, %0 : vector<2x8x32xf32>
    %34 = vector.extract_strided_slice %33 {offsets = [0, 0, 0], sizes = [2, 1, 32], strides = [1, 1, 1]} : vector<2x8x32xf32> to vector<2x1x32xf32>
    %35 = vector.shape_cast %34 : vector<2x1x32xf32> to vector<2x32xf32>
    %36 = vector.extract_strided_slice %33 {offsets = [0, 1, 0], sizes = [2, 1, 32], strides = [1, 1, 1]} : vector<2x8x32xf32> to vector<2x1x32xf32>
    %37 = vector.shape_cast %36 : vector<2x1x32xf32> to vector<2x32xf32>
    %38 = vector.extract_strided_slice %33 {offsets = [0, 2, 0], sizes = [2, 1, 32], strides = [1, 1, 1]} : vector<2x8x32xf32> to vector<2x1x32xf32>
    %39 = vector.shape_cast %38 : vector<2x1x32xf32> to vector<2x32xf32>
    %40 = vector.extract_strided_slice %33 {offsets = [0, 3, 0], sizes = [2, 1, 32], strides = [1, 1, 1]} : vector<2x8x32xf32> to vector<2x1x32xf32>
    %41 = vector.shape_cast %40 : vector<2x1x32xf32> to vector<2x32xf32>
    %42 = vector.extract_strided_slice %33 {offsets = [0, 4, 0], sizes = [2, 1, 32], strides = [1, 1, 1]} : vector<2x8x32xf32> to vector<2x1x32xf32>
    %43 = vector.shape_cast %42 : vector<2x1x32xf32> to vector<2x32xf32>
    %44 = vector.extract_strided_slice %33 {offsets = [0, 5, 0], sizes = [2, 1, 32], strides = [1, 1, 1]} : vector<2x8x32xf32> to vector<2x1x32xf32>
    %45 = vector.shape_cast %44 : vector<2x1x32xf32> to vector<2x32xf32>
    %46 = vector.extract_strided_slice %33 {offsets = [0, 6, 0], sizes = [2, 1, 32], strides = [1, 1, 1]} : vector<2x8x32xf32> to vector<2x1x32xf32>
    %47 = vector.shape_cast %46 : vector<2x1x32xf32> to vector<2x32xf32>
    %48 = vector.extract_strided_slice %33 {offsets = [0, 7, 0], sizes = [2, 1, 32], strides = [1, 1, 1]} : vector<2x8x32xf32> to vector<2x1x32xf32>
    %49 = vector.shape_cast %48 : vector<2x1x32xf32> to vector<2x32xf32>
    %50 = tpu.concatenate %35, %37, %39, %41, %43, %45, %47, %49 in 1 : vector<2x32xf32>, vector<2x32xf32>, vector<2x32xf32>, vector<2x32xf32>, vector<2x32xf32>, vector<2x32xf32>, vector<2x32xf32>, vector<2x32xf32> -> vector<2x256xf32>
    %c0_11 = arith.constant 0 : index
    %c0_12 = arith.constant 0 : index
    %51 = vector.load %arg5[%c0_11, %c0_12] : memref<2x256xf32, #tpu.memory_space<vmem>>, vector<2x256xf32>
    tpu.vector_store %arg5[%c0_11, %c0_12], %50 {strides = array<i32>} : memref<2x256xf32, #tpu.memory_space<vmem>>, vector<2x256xf32>,
    return
  }
  func.func @transform_0(%arg0: i32) -> (i32, i32, i32) {
    %c0_i32 = arith.constant 0 : i32
    %c0_i32_0 = arith.constant 0 : i32
    %c0_i32_1 = arith.constant 0 : i32
    return %arg0, %c0_i32, %c0_i32_0 : i32, i32, i32
  }
  func.func @transform_1(%arg0: i32) -> (i32, i32) {
    %c0_i32 = arith.constant 0 : i32
    %c0_i32_0 = arith.constant 0 : i32
    %c0_i32_1 = arith.constant 0 : i32
    return %c0_i32, %c0_i32_0 : i32, i32
  }
  func.func @transform_2(%arg0: i32) -> (i32, i32) {
    %c0_i32 = arith.constant 0 : i32
    %c0_i32_0 = arith.constant 0 : i32
    %c0_i32_1 = arith.constant 0 : i32
    return %c0_i32, %c0_i32_0 : i32, i32
  }
  func.func @transform_3(%arg0: i32) -> i32 {
    %c0_i32 = arith.constant 0 : i32
    %c0_i32_0 = arith.constant 0 : i32
    return %c0_i32 : i32
  }
  func.func @transform_4(%arg0: i32) -> (i32, i32) {
    %c0_i32 = arith.constant 0 : i32
    %c0_i32_0 = arith.constant 0 : i32
    return %arg0, %c0_i32 : i32, i32
  }
}

</mosaic_0001>

<llo_original>
// kernel: tpu_custom_call.1
$region0: #{tpu_custom_call.1}
  #allocation0 [shape = 'u32[]', space=smem, size = 0x4, offset = 0x4, fixed_abs, tag = 'smem constant byte address 0x4 - core index']
  #allocation1 [shape = 'u32[144,128]{1,0:T(1,128)}', space=vmem, size = 0x12000, scoped, tag = 'internal scratch']
  #allocation2 [shape = 'f32[1]{0:T(128)S(6)}', space=smem, size = 0x200, scoped, tag = 'scoped memory for tpu_custom_call.1']
  %s0 = inlined_call_operand.hbm [shape: f32[2,8,32], index: 0, kind: input, shape index: {}]
  %s1 = inlined_call_operand.hbm [shape: bf16[32,384], index: 1, kind: input, shape index: {}]
  %s2 = inlined_call_operand.vmem [shape: f32[1,384], index: 2, kind: input, shape index: {}]
  %s3 = inlined_call_operand.<no memory space> [shape: f32[1], index: 3, kind: input, shape index: {}]
  %s4 = inlined_call_operand.hbm [shape: f32[2,256], index: 4, kind: output, shape index: {}]
  %s5 = sld [smem:[#allocation0]]
  $region34: #{tpu_custom_call.1} parent=0
    _
  %s7 = ssub.s32 1, %s5
  %s8 = scalar_select 0, %s7, %s5
  %9 = sst [smem:[#allocation2]] %s3
  $region1: #{tpu_custom_call.1} parent=0
    #allocation3 [shape = 'u8[8192]{0}', space=vmem, size = 0x2000, scoped, tag = 'input window, operand 0, single buffered']
    #allocation4 [shape = 's32[1]{0}', space=sflag, size = 0x4, scoped, tag = 'scoped memory for tpu_custom_call.1']
    #allocation5 [shape = 's32[1]{0}', space=sflag, size = 0x4, scoped, tag = 'scoped memory for tpu_custom_call.1']
    #allocation6 [shape = 'u8[24576]{0}', space=vmem, size = 0x6000, scoped, tag = 'input window, operand 1, single buffered']
    #allocation7 [shape = 's32[1]{0}', space=sflag, size = 0x4, scoped, tag = 'scoped memory for tpu_custom_call.1']
    #allocation8 [shape = 'u8[2048]{0}', space=vmem, size = 0x800, scoped, tag = 'output window, operand 0, single buffered']
    %10 = vsyncpa [#allocation4], 0
    %11 = vsyncpa [#allocation7], 0
    %12 = vsyncpa [#allocation5], 0
    // Predicated region
    $region2: #{tpu_custom_call.1} parent=1 // pred_check
      _
    $region3: #{tpu_custom_call.1} parent=1 // pred_check_branch
      %14 = sbr.rel (0) target = $region5
    $region4: #{tpu_custom_call.1} parent=1 // pred_region
      %s16 = ssub.s32 256, 256
      %17 = vsyncadd [#allocation4], %s16
      %s18 = sshll.u32 [#allocation3], 4
      %s19 = int_to_ptr.vmem [resolvable:$true] %s18
      %24 = dma.hbm_to_vmem [thread:$0]  %s0, 256, %s19, [#allocation4], 128, 128, 8
    $region5: #{tpu_custom_call.1} parent=1 // pred_fallthru
      _
    // Predicated region
    $region6: #{tpu_custom_call.1} parent=1 // pred_check
      _
    $region7: #{tpu_custom_call.1} parent=1 // pred_check_branch
      %26 = sbr.rel (0) target = $region9
    $region8: #{tpu_custom_call.1} parent=1 // pred_region
      %s28 = ssub.s32 768, 768
      %29 = vsyncadd [#allocation7], %s28
      %s30 = sshll.u32 [#allocation6], 4
      %s31 = int_to_ptr.vmem [resolvable:$true] %s30
      %36 = dma.hbm_to_vmem [thread:$0]  %s1, 768, %s31, [#allocation7], 192, 192, 12
    $region9: #{tpu_custom_call.1} parent=1 // pred_fallthru
      _
    // Predicated region
    $region10: #{tpu_custom_call.1} parent=1 // pred_check
      _
    $region11: #{tpu_custom_call.1} parent=1 // pred_check_branch
      %38 = sbr.rel (0) target = $region13
    $region12: #{tpu_custom_call.1} parent=1 // pred_region
      _
    $region13: #{tpu_custom_call.1} parent=1 // pred_fallthru
      _
    // Predicated region
    $region14: #{tpu_custom_call.1} parent=1 // pred_check
      _
    $region15: #{tpu_custom_call.1} parent=1 // pred_check_branch
      %40 = sbr.rel (0) target = $region17
    $region16: #{tpu_custom_call.1} parent=1 // pred_region
      _
    $region17: #{tpu_custom_call.1} parent=1 // pred_fallthru
      _
    // Predicated region
    $region18: #{tpu_custom_call.1} parent=1 // pred_check
      _
    $region19: #{tpu_custom_call.1} parent=1 // pred_check_branch
      %42 = sbr.rel (0) target = $region21
    $region20: #{tpu_custom_call.1} parent=1 // pred_region
      %43 = dma.done [#allocation4], 256
    $region21: #{tpu_custom_call.1} parent=1 // pred_fallthru
      _
    // Predicated region
    $region22: #{tpu_custom_call.1} parent=1 // pred_check
      _
    $region23: #{tpu_custom_call.1} parent=1 // pred_check_branch
      %45 = sbr.rel (0) target = $region25
    $region24: #{tpu_custom_call.1} parent=1 // pred_region
      %46 = dma.done [#allocation7], 768
    $region25: #{tpu_custom_call.1} parent=1 // pred_fallthru
      _
    %v48 = vld [vmem:[#allocation3] sm:$0xff]
    %v49 = vld [vmem:[#allocation3 + $0x8] sm:$0xff]
    %v50 = vpack.c.bf16 %v49, %v48
    %v51 = vld [vmem:[#allocation6] sm:$0xff]
    %v52 = vld [vmem:[#allocation6 + $0x8] sm:$0xf]
    %v53 = vld [vmem:[#allocation6 + $0xc] sm:$0xff]
    %v54 = vld [vmem:[#allocation6 + $0x14] sm:$0xf]
    %v55 = vld [vmem:[#allocation6 + $0x18] sm:$0xff]
    %v56 = vld [vmem:[#allocation6 + $0x20] sm:$0xf]
    %v57 = vld [vmem:[#allocation6 + $0x24] sm:$0xff]
    %v58 = vld [vmem:[#allocation6 + $0x2c] sm:$0xf]
    %v59 = vld [vmem:[%s2] sm:$0x7]
    %v61 = vlaneseq
    %v62 = vshrl.u32 %v61, 7
    %v63 = vsub.s32 0, %v62
    %v64 = vrot.slane %v59, %v63
    %v65 = vlaneseq
    %v66 = vshrl.u32 %v65, 7
    %v67 = vsub.s32 1, %v66
    %v68 = vrot.slane %v59, %v67
    %v69 = vlaneseq
    %v70 = vshrl.u32 %v69, 7
    %v71 = vsub.s32 2, %v70
    %v72 = vrot.slane %v59, %v71
    %v84 = vunpack.c.l.b16 %v51
    %v85 = vunpack.c.h.b16 %v51
    %v86 = vunpack.c.l.b16 %v52
    %v87 = vunpack.c.l.b16 %v53
    %v88 = vunpack.c.h.b16 %v53
    %v89 = vunpack.c.l.b16 %v54
    %v90 = vunpack.c.l.b16 %v55
    %v91 = vunpack.c.h.b16 %v55
    %v92 = vunpack.c.l.b16 %v56
    %v93 = vunpack.c.l.b16 %v57
    %v94 = vunpack.c.h.b16 %v57
    %v95 = vunpack.c.l.b16 %v58
    %v96 = vpack.c.b16 %v87, %v84
    %v97 = vpack.c.b16 %v88, %v85
    %v98 = vpack.c.b16 %v89, %v86
    %v99 = vpack.c.b16 %v93, %v90
    %v100 = vpack.c.b16 %v94, %v91
    %v101 = vpack.c.b16 %v95, %v92
    %vm108 = vcmask 261120
    %v110 = vsel %vm108, %v50, 0
    %112 = vmatprep.subr.bf16.mxu0 0
    %113 = vmatpush1.bf16.msra.mxu0 0
    %114 = vmatprep.subr.bf16.mxu0 0
    %115 = vmatpush1.bf16.msra.mxu0 0
    %116 = vmatprep.subr.bf16.mxu0 0
    %117 = vmatpush1.bf16.msra.mxu0 0
    %118 = vmatprep.subr.bf16.mxu0 0
    %119 = vmatpush1.bf16.msra.mxu0 0
    %120 = vmatprep.subr.bf16.mxu0 0
    %121 = vmatpush1.bf16.msra.mxu0 0
    %122 = vmatprep.subr.bf16.mxu0 0
    %123 = vmatpush1.bf16.msra.mxu0 0
    %124 = vmatprep.subr.bf16.mxu0 %v100
    %125 = vmatpush1.bf16.msra.mxu0 %v99
    %126 = vmatprep.subr.bf16.mxu0 %v97
    %127 = vmatpush1.bf16.msra.mxu0 %v96
    %128 = vmatprep.subr.bf16.mxu0 0
    %129 = vmatpush2.bf16.msra.mxu0 0
    %130 = vmatprep.subr.bf16.mxu0 0
    %131 = vmatpush2.bf16.msra.mxu0 0
    %132 = vmatprep.subr.bf16.mxu0 0
    %133 = vmatpush2.bf16.msra.mxu0 0
    %134 = vmatprep.subr.bf16.mxu0 0
    %135 = vmatpush2.bf16.msra.mxu0 0
    %136 = vmatprep.subr.bf16.mxu0 0
    %137 = vmatpush2.bf16.msra.mxu0 0
    %138 = vmatprep.subr.bf16.mxu0 0
    %139 = vmatpush2.bf16.msra.mxu0 0
    %140 = vmatprep.subr.bf16.mxu0 0
    %141 = vmatpush2.bf16.msra.mxu0 0
    %142 = vmatprep.subr.bf16.mxu0 0
    %143 = vmatpush2.bf16.msra.mxu0 0
    %144 = vmatprep.mubr.bf16.mxu0 0
    %145 = vmatmul.mubr.bf16.gmra.mxu0 %v110
    %v146 = vpop.f32.mrf.mxu0
    %v147 = vadd.f32 %v64, %v146
    %v148 = vpop.f32.mrf.mxu0
    %v149 = vadd.f32 %v68, %v148
    %v150 = vpop.f32.mrf.mxu0
    %v151 = vadd.f32 %v64, %v150
    %v152 = vpop.f32.mrf.mxu0
    %v153 = vadd.f32 %v68, %v152
    %154 = vdwg.mxu0
    %155 = vmatprep.subr.bf16.mxu0 0
    %156 = vmatpush1.bf16.msra.mxu0 0
    %157 = vmatprep.subr.bf16.mxu0 0
    %158 = vmatpush1.bf16.msra.mxu0 0
    %159 = vmatprep.subr.bf16.mxu0 0
    %160 = vmatpush1.bf16.msra.mxu0 0
    %161 = vmatprep.subr.bf16.mxu0 0
    %162 = vmatpush1.bf16.msra.mxu0 0
    %163 = vmatprep.subr.bf16.mxu0 0
    %164 = vmatpush1.bf16.msra.mxu0 0
    %165 = vmatprep.subr.bf16.mxu0 0
    %166 = vmatpush1.bf16.msra.mxu0 0
    %167 = vmatprep.subr.bf16.mxu0 0
    %168 = vmatpush1.bf16.msra.mxu0 %v101
    %169 = vmatprep.subr.bf16.mxu0 0
    %170 = vmatpush1.bf16.msra.mxu0 %v98
    %171 = vmatprep.subr.bf16.mxu0 0
    %172 = vmatpush2.bf16.msra.mxu0 0
    %173 = vmatprep.subr.bf16.mxu0 0
    %174 = vmatpush2.bf16.msra.mxu0 0
    %175 = vmatprep.subr.bf16.mxu0 0
    %176 = vmatpush2.bf16.msra.mxu0 0
    %177 = vmatprep.subr.bf16.mxu0 0
    %178 = vmatpush2.bf16.msra.mxu0 0
    %179 = vmatprep.subr.bf16.mxu0 0
    %180 = vmatpush2.bf16.msra.mxu0 0
    %181 = vmatprep.subr.bf16.mxu0 0
    %182 = vmatpush2.bf16.msra.mxu0 0
    %183 = vmatprep.subr.bf16.mxu0 0
    %184 = vmatpush2.bf16.msra.mxu0 0
    %185 = vmatprep.subr.bf16.mxu0 0
    %186 = vmatpush2.bf16.msra.mxu0 0
    %187 = vmatprep.mubr.bf16.mxu0 0
    %188 = vmatmul.mubr.bf16.gmra.mxu0 %v110
    %v189 = vpop.f32.mrf.mxu0
    %v190 = vadd.f32 %v72, %v189
    %v191 = vpop.f32.mrf.mxu0
    %v192 = vpop.f32.mrf.mxu0
    %v193 = vadd.f32 %v72, %v192
    %v194 = vpop.f32.mrf.mxu0
    %195 = vdwg.mxu0
    %v196 = vpack.c.bf16 %v149, %v149
    %v197 = vpack.c.bf16 %v153, %v153
    %v198 = vpack.c.bf16 %v147, %v147
    %v199 = vpack.c.bf16 %v151, %v151
    %200 = vxpose.xlu0.c.b16.start [1/8] %v196, 128
    %201 = vxpose.xlu0.c.b16.cont [2/8] 0, 128
    %202 = vxpose.xlu0.c.b16.cont [3/8] 0, 128
    %203 = vxpose.xlu0.c.b16.cont [4/8] 0, 128
    %204 = vxpose.xlu0.c.b16.cont [5/8] 0, 128
    %205 = vxpose.xlu0.c.b16.cont [6/8] 0, 128
    %206 = vxpose.xlu0.c.b16.cont [7/8] 0, 128
    %207 = vxpose.xlu0.c.b16.end [8/8] 0, 128
    %v208 = vpop.trf.xlu0
    %v209 = vpop.trf.xlu0
    %v210 = vpop.trf.xlu0
    %v211 = vpop.trf.xlu0
    %v212 = vpop.trf.xlu0
    %v213 = vpop.trf.xlu0
    %v214 = vpop.trf.xlu0
    %v215 = vpop.trf.xlu0
    %vm216 = vcmask 64512
    %v218 = vsel %vm216, %v208, 0
    %v221 = vsel %vm216, %v209, 0
    %vm223 = vcmask 1043456
    %v225 = vsel %vm223, %v198, 0
    %227 = vmatprep.subr.bf16.mxu0 0
    %228 = vmatpush1.bf16.msra.mxu0 0
    %229 = vmatprep.subr.bf16.mxu0 0
    %230 = vmatpush1.bf16.msra.mxu0 0
    %231 = vmatprep.subr.bf16.mxu0 0
    %232 = vmatpush1.bf16.msra.mxu0 0
    %233 = vmatprep.subr.bf16.mxu0 0
    %234 = vmatpush1.bf16.msra.mxu0 0
    %235 = vmatprep.subr.bf16.mxu0 0
    %236 = vmatpush1.bf16.msra.mxu0 0
    %237 = vmatprep.subr.bf16.mxu0 0
    %238 = vmatpush1.bf16.msra.mxu0 0
    %239 = vmatprep.subr.bf16.mxu0 0
    %240 = vmatpush1.bf16.msra.mxu0 0
    %241 = vmatprep.subr.bf16.mxu0 0
    %242 = vmatpush1.bf16.msra.mxu0 %v225
    %243 = vmatprep.subr.bf16.mxu0 0
    %244 = vmatpush2.bf16.msra.mxu0 0
    %245 = vmatprep.subr.bf16.mxu0 0
    %246 = vmatpush2.bf16.msra.mxu0 0
    %247 = vmatprep.subr.bf16.mxu0 0
    %248 = vmatpush2.bf16.msra.mxu0 0
    %249 = vmatprep.subr.bf16.mxu0 0
    %250 = vmatpush2.bf16.msra.mxu0 0
    %251 = vmatprep.subr.bf16.mxu0 0
    %252 = vmatpush2.bf16.msra.mxu0 0
    %253 = vmatprep.subr.bf16.mxu0 0
    %254 = vmatpush2.bf16.msra.mxu0 0
    %255 = vmatprep.subr.bf16.mxu0 0
    %256 = vmatpush2.bf16.msra.mxu0 0
    %257 = vmatprep.subr.bf16.mxu0 0
    %258 = vmatpush2.bf16.msra.mxu0 0
    %259 = vmatprep.mubr.bf16.mxu0 0
    %260 = vmatmul.mubr.bf16.gmra.mxu0 %v218
    %v261 = vpop.f32.mrf.mxu0
    %v262 = vadd.f32 0.0, %v261
    %v263 = vpop.f32.mrf.mxu0
    %v264 = vpop.f32.mrf.mxu0
    %v265 = vadd.f32 0.0, %v264
    %v266 = vpop.f32.mrf.mxu0
    %267 = vmatprep.mubr.bf16.mxu0 0
    %268 = vmatmul.mubr.bf16.gmra.mxu0 %v221
    %v269 = vpop.f32.mrf.mxu0
    %v270 = vadd.f32 0.0, %v269
    %v271 = vpop.f32.mrf.mxu0
    %v272 = vpop.f32.mrf.mxu0
    %v273 = vadd.f32 0.0, %v272
    %v274 = vpop.f32.mrf.mxu0
    %275 = vdwg.mxu0
    %276 = vxpose.xlu0.c.b16.start [1/8] %v197, 128
    %277 = vxpose.xlu0.c.b16.cont [2/8] 0, 128
    %278 = vxpose.xlu0.c.b16.cont [3/8] 0, 128
    %279 = vxpose.xlu0.c.b16.cont [4/8] 0, 128
    %280 = vxpose.xlu0.c.b16.cont [5/8] 0, 128
    %281 = vxpose.xlu0.c.b16.cont [6/8] 0, 128
    %282 = vxpose.xlu0.c.b16.cont [7/8] 0, 128
    %283 = vxpose.xlu0.c.b16.end [8/8] 0, 128
    %v284 = vpop.trf.xlu0
    %v285 = vpop.trf.xlu0
    %v286 = vpop.trf.xlu0
    %v287 = vpop.trf.xlu0
    %v288 = vpop.trf.xlu0
    %v289 = vpop.trf.xlu0
    %v290 = vpop.trf.xlu0
    %v291 = vpop.trf.xlu0
    %v293 = vsel %vm216, %v284, 0
    %v296 = vsel %vm216, %v285, 0
    %v299 = vsel %vm223, %v199, 0
    %301 = vmatprep.subr.bf16.mxu0 0
    %302 = vmatpush1.bf16.msra.mxu0 0
    %303 = vmatprep.subr.bf16.mxu0 0
    %304 = vmatpush1.bf16.msra.mxu0 0
    %305 = vmatprep.subr.bf16.mxu0 0
    %306 = vmatpush1.bf16.msra.mxu0 0
    %307 = vmatprep.subr.bf16.mxu0 0
    %308 = vmatpush1.bf16.msra.mxu0 0
    %309 = vmatprep.subr.bf16.mxu0 0
    %310 = vmatpush1.bf16.msra.mxu0 0
    %311 = vmatprep.subr.bf16.mxu0 0
    %312 = vmatpush1.bf16.msra.mxu0 0
    %313 = vmatprep.subr.bf16.mxu0 0
    %314 = vmatpush1.bf16.msra.mxu0 0
    %315 = vmatprep.subr.bf16.mxu0 0
    %316 = vmatpush1.bf16.msra.mxu0 %v299
    %317 = vmatprep.subr.bf16.mxu0 0
    %318 = vmatpush2.bf16.msra.mxu0 0
    %319 = vmatprep.subr.bf16.mxu0 0
    %320 = vmatpush2.bf16.msra.mxu0 0
    %321 = vmatprep.subr.bf16.mxu0 0
    %322 = vmatpush2.bf16.msra.mxu0 0
    %323 = vmatprep.subr.bf16.mxu0 0
    %324 = vmatpush2.bf16.msra.mxu0 0
    %325 = vmatprep.subr.bf16.mxu0 0
    %326 = vmatpush2.bf16.msra.mxu0 0
    %327 = vmatprep.subr.bf16.mxu0 0
    %328 = vmatpush2.bf16.msra.mxu0 0
    %329 = vmatprep.subr.bf16.mxu0 0
    %330 = vmatpush2.bf16.msra.mxu0 0
    %331 = vmatprep.subr.bf16.mxu0 0
    %332 = vmatpush2.bf16.msra.mxu0 0
    %333 = vmatprep.mubr.bf16.mxu0 0
    %334 = vmatmul.mubr.bf16.gmra.mxu0 %v293
    %v335 = vpop.f32.mrf.mxu0
    %v336 = vadd.f32 0.0, %v335
    %v337 = vpop.f32.mrf.mxu0
    %v338 = vpop.f32.mrf.mxu0
    %v339 = vadd.f32 0.0, %v338
    %v340 = vpop.f32.mrf.mxu0
    %341 = vmatprep.mubr.bf16.mxu0 0
    %342 = vmatmul.mubr.bf16.gmra.mxu0 %v296
    %v343 = vpop.f32.mrf.mxu0
    %v344 = vadd.f32 0.0, %v343
    %v345 = vpop.f32.mrf.mxu0
    %v346 = vpop.f32.mrf.mxu0
    %v347 = vadd.f32 0.0, %v346
    %v348 = vpop.f32.mrf.mxu0
    %349 = vdwg.mxu0
    %v350 = vsel %vm108, %v262, -inf
    %v351 = vsel %vm108, %v265, -inf
    %v352 = vsel %vm108, %v270, -inf
    %v353 = vmax.f32 %v350, %v352
    %v354 = vsel %vm108, %v273, -inf
    %v355 = vmax.f32 %v351, %v354
    %v356 = vmax.f32 %v353, %v355
    %v357 = vrot.slane %v356, 4
    %v358 = vmax.f32 %v356, %v357
    %v359 = vrot.slane %v358, 2
    %v360 = vmax.f32 %v358, %v359
    %v361 = vrot.slane %v360, 1
    %v362 = vmax.f32 %v360, %v361
    %v363 = vsel %vm108, %v336, -inf
    %v364 = vsel %vm108, %v339, -inf
    %v365 = vsel %vm108, %v344, -inf
    %v366 = vmax.f32 %v363, %v365
    %v367 = vsel %vm108, %v347, -inf
    %v368 = vmax.f32 %v364, %v367
    %v369 = vmax.f32 %v366, %v368
    %v370 = vrot.slane %v369, 4
    %v371 = vmax.f32 %v369, %v370
    %v372 = vrot.slane %v371, 2
    %v373 = vmax.f32 %v371, %v372
    %v374 = vrot.slane %v373, 1
    %v375 = vmax.f32 %v373, %v374
    %v376 = vsub.f32 %v262, %v362
    %v377 = vsub.f32 %v265, %v362
    %v378 = vsub.f32 %v270, %v362
    %v379 = vsub.f32 %v273, %v362
    %v380 = vsub.f32 %v336, %v375
    %v381 = vsub.f32 %v339, %v375
    %v382 = vsub.f32 %v344, %v375
    %v383 = vsub.f32 %v347, %v375
    %v384 = vmul.f32 %v376, 1.442695
    %v385 = vpow.pop %v384
    %v386 = vmul.f32 %v377, 1.442695
    %v387 = vpow.pop %v386
    %v388 = vmul.f32 %v378, 1.442695
    %v389 = vpow.pop %v388
    %v390 = vmul.f32 %v379, 1.442695
    %v391 = vpow.pop %v390
    %v392 = vmul.f32 %v380, 1.442695
    %v393 = vpow.pop %v392
    %v394 = vmul.f32 %v381, 1.442695
    %v395 = vpow.pop %v394
    %v396 = vmul.f32 %v382, 1.442695
    %v397 = vpow.pop %v396
    %v398 = vmul.f32 %v383, 1.442695
    %v399 = vpow.pop %v398
    %v400 = vsel %vm108, %v385, 0.0
    %v401 = vsel %vm108, %v387, 0.0
    %v402 = vadd.f32 %v400, %v401
    %v403 = vsel %vm108, %v389, 0.0
    %v404 = vadd.f32 %v402, %v403
    %v405 = vsel %vm108, %v391, 0.0
    %v406 = vadd.f32 %v404, %v405
    %v407 = vrot.slane %v406, 4
    %v408 = vadd.f32 %v406, %v407
    %v409 = vrot.slane %v408, 2
    %v410 = vadd.f32 %v408, %v409
    %v411 = vrot.slane %v410, 1
    %v412 = vadd.f32 %v410, %v411
    %v413 = vsel %vm108, %v393, 0.0
    %v414 = vsel %vm108, %v395, 0.0
    %v415 = vadd.f32 %v413, %v414
    %v416 = vsel %vm108, %v397, 0.0
    %v417 = vadd.f32 %v415, %v416
    %v418 = vsel %vm108, %v399, 0.0
    %v419 = vadd.f32 %v417, %v418
    %v420 = vrot.slane %v419, 4
    %v421 = vadd.f32 %v419, %v420
    %v422 = vrot.slane %v421, 2
    %v423 = vadd.f32 %v421, %v422
    %v424 = vrot.slane %v423, 1
    %v425 = vadd.f32 %v423, %v424
    %v426 = vrcp.pop %v412
    %v427 = vrcp.pop %v425
    %v428 = vmul.f32 %v385, %v426
    %v429 = vmul.f32 %v387, %v426
    %v430 = vmul.f32 %v389, %v426
    %v431 = vmul.f32 %v391, %v426
    %v432 = vmul.f32 %v393, %v427
    %v433 = vmul.f32 %v395, %v427
    %v434 = vmul.f32 %v397, %v427
    %v435 = vmul.f32 %v399, %v427
    %v436 = vpack.c.bf16 %v190, %v190
    %v437 = vpack.c.bf16 %v193, %v193
    %v438 = vpack.c.bf16 %v429, %v428
    %v439 = vpack.c.bf16 %v431, %v430
    %v440 = vpack.c.bf16 %v433, %v432
    %v441 = vpack.c.bf16 %v435, %v434
    %v443 = vsel %vm108, %v436, 0
    %445 = vmatprep.subr.bf16.mxu0 0
    %446 = vmatpush1.bf16.msra.mxu0 0
    %447 = vmatprep.subr.bf16.mxu0 0
    %448 = vmatpush1.bf16.msra.mxu0 0
    %449 = vmatprep.subr.bf16.mxu0 0
    %450 = vmatpush1.bf16.msra.mxu0 0
    %451 = vmatprep.subr.bf16.mxu0 0
    %452 = vmatpush1.bf16.msra.mxu0 0
    %453 = vmatprep.subr.bf16.mxu0 0
    %454 = vmatpush1.bf16.msra.mxu0 0
    %455 = vmatprep.subr.bf16.mxu0 0
    %456 = vmatpush1.bf16.msra.mxu0 0
    %457 = vmatprep.subr.bf16.mxu0 0
    %458 = vmatpush1.bf16.msra.mxu0 %v439
    %459 = vmatprep.subr.bf16.mxu0 0
    %460 = vmatpush1.bf16.msra.mxu0 %v438
    %461 = vmatprep.subr.bf16.mxu0 0
    %462 = vmatpush2.bf16.msra.mxu0 0
    %463 = vmatprep.subr.bf16.mxu0 0
    %464 = vmatpush2.bf16.msra.mxu0 0
    %465 = vmatprep.subr.bf16.mxu0 0
    %466 = vmatpush2.bf16.msra.mxu0 0
    %467 = vmatprep.subr.bf16.mxu0 0
    %468 = vmatpush2.bf16.msra.mxu0 0
    %469 = vmatprep.subr.bf16.mxu0 0
    %470 = vmatpush2.bf16.msra.mxu0 0
    %471 = vmatprep.subr.bf16.mxu0 0
    %472 = vmatpush2.bf16.msra.mxu0 0
    %473 = vmatprep.subr.bf16.mxu0 0
    %474 = vmatpush2.bf16.msra.mxu0 0
    %475 = vmatprep.subr.bf16.mxu0 0
    %476 = vmatpush2.bf16.msra.mxu0 0
    %477 = vmatprep.mubr.bf16.mxu0 0
    %478 = vmatmul.mubr.bf16.gmra.mxu0 %v443
    %v479 = vpop.f32.mrf.mxu0
    %v480 = vadd.f32 0.0, %v479
    %v481 = vpop.f32.mrf.mxu0
    %v482 = vpop.f32.mrf.mxu0
    %v483 = vpop.f32.mrf.mxu0
    %484 = vdwg.mxu0
    %v486 = vsel %vm108, %v437, 0
    %488 = vmatprep.subr.bf16.mxu0 0
    %489 = vmatpush1.bf16.msra.mxu0 0
    %490 = vmatprep.subr.bf16.mxu0 0
    %491 = vmatpush1.bf16.msra.mxu0 0
    %492 = vmatprep.subr.bf16.mxu0 0
    %493 = vmatpush1.bf16.msra.mxu0 0
    %494 = vmatprep.subr.bf16.mxu0 0
    %495 = vmatpush1.bf16.msra.mxu0 0
    %496 = vmatprep.subr.bf16.mxu0 0
    %497 = vmatpush1.bf16.msra.mxu0 0
    %498 = vmatprep.subr.bf16.mxu0 0
    %499 = vmatpush1.bf16.msra.mxu0 0
    %500 = vmatprep.subr.bf16.mxu0 0
    %501 = vmatpush1.bf16.msra.mxu0 %v441
    %502 = vmatprep.subr.bf16.mxu0 0
    %503 = vmatpush1.bf16.msra.mxu0 %v440
    %504 = vmatprep.subr.bf16.mxu0 0
    %505 = vmatpush2.bf16.msra.mxu0 0
    %506 = vmatprep.subr.bf16.mxu0 0
    %507 = vmatpush2.bf16.msra.mxu0 0
    %508 = vmatprep.subr.bf16.mxu0 0
    %509 = vmatpush2.bf16.msra.mxu0 0
    %510 = vmatprep.subr.bf16.mxu0 0
    %511 = vmatpush2.bf16.msra.mxu0 0
    %512 = vmatprep.subr.bf16.mxu0 0
    %513 = vmatpush2.bf16.msra.mxu0 0
    %514 = vmatprep.subr.bf16.mxu0 0
    %515 = vmatpush2.bf16.msra.mxu0 0
    %516 = vmatprep.subr.bf16.mxu0 0
    %517 = vmatpush2.bf16.msra.mxu0 0
    %518 = vmatprep.subr.bf16.mxu0 0
    %519 = vmatpush2.bf16.msra.mxu0 0
    %520 = vmatprep.mubr.bf16.mxu0 0
    %521 = vmatmul.mubr.bf16.gmra.mxu0 %v486
    %v522 = vpop.f32.mrf.mxu0
    %v523 = vadd.f32 0.0, %v522
    %v524 = vpop.f32.mrf.mxu0
    %v525 = vpop.f32.mrf.mxu0
    %v526 = vpop.f32.mrf.mxu0
    %527 = vdwg.mxu0
    %s528 = sld [smem:[#allocation2]]
    %v529 = vstv %s528
    %v530 = vmul.f32 %v529, %v480
    %v531 = vmul.f32 %v529, %v523
    %v532 = vadd.f32 %v530, %v48
    %v533 = vadd.f32 %v531, %v49
    %v536 = vrot.slane %v533, 7
    %vm537 = vcmask 1041409
    %v538 = vsel %vm537, %v536, %v532
    %v540 = vrot.slane %v532, 1
    %v541 = vsel %vm537, %v533, %v540
    %542 = vrot.lane.b32.xlu0 %v541, 32
    %v543 = vpop.permute.xlu0 %542
    %v545 = vrot.slane %v532, 2
    %v546 = vrot.slane %v533, 1
    %v547 = vsel %vm537, %v546, %v545
    %548 = vrot.lane.b32.xlu0 %v547, 64
    %v549 = vpop.permute.xlu0 %548
    %v551 = vrot.slane %v532, 3
    %v552 = vrot.slane %v533, 2
    %v553 = vsel %vm537, %v552, %v551
    %554 = vrot.lane.b32.xlu0 %v553, 96
    %v555 = vpop.permute.xlu0 %554
    %v557 = vrot.slane %v532, 4
    %v558 = vrot.slane %v533, 3
    %v559 = vsel %vm537, %v558, %v557
    %v561 = vrot.slane %v532, 5
    %v562 = vrot.slane %v533, 4
    %v563 = vsel %vm537, %v562, %v561
    %564 = vrot.lane.b32.xlu0 %v563, 32
    %v565 = vpop.permute.xlu0 %564
    %v567 = vrot.slane %v532, 6
    %v568 = vrot.slane %v533, 5
    %v569 = vsel %vm537, %v568, %v567
    %570 = vrot.lane.b32.xlu0 %v569, 64
    %v571 = vpop.permute.xlu0 %570
    %v573 = vrot.slane %v532, 7
    %v574 = vrot.slane %v533, 6
    %v575 = vsel %vm537, %v574, %v573
    %576 = vrot.lane.b32.xlu0 %v575, 96
    %v577 = vpop.permute.xlu0 %576
    %v579 = vsel %vm108, %v538, %v543
    %vm580 = vcmask 523264
    %v581 = vsel %vm580, %v579, %v549
    %vm582 = vcmask 785408
    %v583 = vsel %vm582, %v581, %v555
    %v584 = vsel %vm108, %v559, %v565
    %v585 = vsel %vm580, %v584, %v571
    %v586 = vsel %vm582, %v585, %v577
    %v589 = vcombine.low %v583, %v586
    %v591 = vunpack.c.l.s4 1983009808
    %v592 = vunpack.c.0.s8 %v591
    %v593 = vlaneseq
    %v594 = vshrl.u32 %v593, 7
    %v595 = vsub.s32 %v592, %v594
    %v596 = vrot.slane %v589, %v595
    %598 = vst [vmem:[#allocation8] sm:$0xf] %v596
    // Predicated region
    $region26: #{tpu_custom_call.1} parent=1 // pred_check
      _
    $region27: #{tpu_custom_call.1} parent=1 // pred_check_branch
      %600 = sbr.rel (0) target = $region29
    $region28: #{tpu_custom_call.1} parent=1 // pred_region
      %s602 = ssub.s32 64, 64
      %603 = vsyncadd [#allocation5], %s602
      %s605 = sshll.u32 [#allocation8], 4
      %s606 = int_to_ptr.vmem [resolvable:$true] %s605
      %608 = dma.vmem_to_hbm [thread:$0]  %s606, 64, %s4, [#allocation5]
    $region29: #{tpu_custom_call.1} parent=1 // pred_fallthru
      _
    // Predicated region
    $region30: #{tpu_custom_call.1} parent=1 // pred_check
      _
    $region31: #{tpu_custom_call.1} parent=1 // pred_check_branch
      %610 = sbr.rel (0) target = $region33
    $region32: #{tpu_custom_call.1} parent=1 // pred_region
      %611 = dma.done [#allocation5], 64
    $region33: #{tpu_custom_call.1} parent=1 // pred_fallthru
      _
    %612 = vsyncpa [#allocation4], 1
    %613 = vsyncpa [#allocation7], 1
    %614 = vsyncpa [#allocation5], 1

</llo_original>
